<compile_context>
chip_gen: v7x
topology: tpu7x:2x2x1
jax: 0.10.0
libtpu: 0.0.40
codegen_flags: <defaults>
</compile_context>

<pallas_src>
import functools

import jax
import jax.numpy as jnp
from jax.experimental import pallas as pl
from jax.experimental.pallas import tpu as pltpu

# ----------------------- DenseNet-121 configuration ------------------------
GROWTH = 32
BLOCK_CONFIG = (6, 12, 24, 16)
NUM_INIT = 64
BN_SIZE = 4
EPS = 1e-5
LANE = 128                     # TPU lane width; narrow outputs padded to this


def _round_up(x, m):
    return ((x + m - 1) // m) * m


def _pick_tile(dim, prefs):
    for t in prefs:
        if dim % t == 0:
            return t
    return dim


def _choose_m(M):
    Mp = _round_up(M, 8)
    for t in (1024, 512, 256):
        if Mp % t == 0:
            return t, Mp
    if Mp <= 1024:
        return Mp, Mp
    Mp = _round_up(Mp, 256)    # cdiv-style padding instead of a huge full-M block
    return 256, Mp


def _choose_k(K, prefer_small):
    Kp = _round_up(K, 32)
    prefs = (256, 384, 512) if prefer_small else (512, 384, 256)
    for t in prefs:
        if Kp % t == 0:
            return t, Kp
    if Kp <= 1024:
        return Kp, Kp
    Kp = _round_up(K, 128)
    return 128, Kp


def _choose_n(N):
    for t in (512, 256, 128):
        if N % t == 0:
            return t
    return N


# -------- fused (BN+ReLU prologue) -> matmul -> (BN+ReLU epilogue) ----------
def _make_mm_kernel(has_pre, has_post):
    def kernel(*refs):
        it = iter(refs)
        a_ref = next(it)
        if has_pre:
            s1_ref = next(it)
            b1_ref = next(it)
        w_ref = next(it)
        if has_post:
            s2_ref = next(it)
            b2_ref = next(it)
        o_ref = next(it)
        acc_ref = next(it)

        @pl.when(pl.program_id(2) == 0)
        def _init():
            acc_ref[...] = jnp.zeros_like(acc_ref)

        if has_pre:
            a = a_ref[...].astype(jnp.float32) * s1_ref[...] + b1_ref[...]
            a = jnp.maximum(a, 0.0).astype(jnp.bfloat16)
        else:
            a = a_ref[...]
        acc_ref[...] += jnp.dot(a, w_ref[...],
                                preferred_element_type=jnp.float32)

        @pl.when(pl.program_id(2) == pl.num_programs(2) - 1)
        def _finalize():
            acc = acc_ref[...]
            if has_post:
                acc = jnp.maximum(acc * s2_ref[...] + b2_ref[...], 0.0)
            o_ref[...] = acc.astype(o_ref.dtype)

    return kernel


def _fused_matmul_impl(a, w, pre, post, out_dtype):
    """out = epilogue( prologue(a) @ w ); prologue/epilogue are optional
    per-channel (scale, bias) affines + ReLU (eval-mode BatchNorm)."""
    M, K = a.shape
    _, N = w.shape
    TM, Mp = _choose_m(M)
    TN = _choose_n(N)
    TK, Kp = _choose_k(K, prefer_small=pre is not None)
    # Give a v7x megacore at least two parallel grid points; on 1-TC chips
    # this only costs one extra (cheap) grid step.
    if Mp // TM == 1 and N // TN == 1 and TM >= 16 and TM % 16 == 0:
        TM //= 2

    a = a.astype(jnp.bfloat16)
    w = w.astype(jnp.bfloat16)
    if Mp != M or Kp != K:
        a = jnp.pad(a, ((0, Mp - M), (0, Kp - K)))
    if Kp != K:
        w = jnp.pad(w, ((0, Kp - K), (0, 0)))

    operands = [a]
    in_specs = [pl.BlockSpec((TM, TK), lambda i, j, k: (i, k))]
    if pre is not None:
        s1, b1 = pre
        s1 = s1.astype(jnp.float32)
        b1 = b1.astype(jnp.float32)
        if Kp != K:
            s1 = jnp.pad(s1, (0, Kp - K))
            b1 = jnp.pad(b1, (0, Kp - K))
        operands += [s1.reshape(1, Kp), b1.reshape(1, Kp)]
        in_specs += [pl.BlockSpec((1, TK), lambda i, j, k: (0, k)),
                     pl.BlockSpec((1, TK), lambda i, j, k: (0, k))]
    operands.append(w)
    in_specs.append(pl.BlockSpec((TK, TN), lambda i, j, k: (k, j)))
    if post is not None:
        s2, b2 = post
        operands += [s2.reshape(1, N).astype(jnp.float32),
                     b2.reshape(1, N).astype(jnp.float32)]
        in_specs += [pl.BlockSpec((1, TN), lambda i, j, k: (0, j)),
                     pl.BlockSpec((1, TN), lambda i, j, k: (0, j))]

    out = pl.pallas_call(
        _make_mm_kernel(pre is not None, post is not None),
        out_shape=jax.ShapeDtypeStruct((Mp, N), out_dtype),
        grid_spec=pltpu.PrefetchScalarGridSpec(
            num_scalar_prefetch=0,
            grid=(Mp // TM, N // TN, Kp // TK),
            in_specs=in_specs,
            out_specs=pl.BlockSpec((TM, TN), lambda i, j, k: (i, j)),
            scratch_shapes=[pltpu.VMEM((TM, TN), jnp.float32)]),
        compiler_params=pltpu.CompilerParams(
            dimension_semantics=("parallel", "parallel", "arbitrary")),
        cost_estimate=pl.CostEstimate(
            flops=2 * Mp * N * Kp, transcendentals=0,
            bytes_accessed=(Mp * Kp * 2 + Kp * N * 2
                            + Mp * N * jnp.dtype(out_dtype).itemsize)),
    )(*operands)
    return out[:M] if Mp != M else out


@functools.partial(jax.jit, static_argnames=("out_dtype",))
def _mm_plain(a, w, *, out_dtype):
    return _fused_matmul_impl(a, w, None, None, out_dtype)


@jax.jit
def _mm_pre(a, w, s1, b1):
    return _fused_matmul_impl(a, w, (s1, b1), None, jnp.bfloat16)


@jax.jit
def _mm_post(a, w, s2, b2):
    return _fused_matmul_impl(a, w, None, (s2, b2), jnp.bfloat16)


@jax.jit
def _mm_pre_post(a, w, s1, b1, s2, b2):
    return _fused_matmul_impl(a, w, (s1, b1), (s2, b2), jnp.bfloat16)


# ----------------------------- max pool (stem) ------------------------------
def _max9_kernel(*refs):
    o_ref = refs[-1]
    m = refs[0][...]
    for r in refs[1:-1]:
        m = jnp.maximum(m, r[...])
    o_ref[...] = m


@jax.jit
def _max9(*slices):
    M, C = slices[0].shape
    TM = _pick_tile(M, (1024, 512, 256, 128, 64, 32, 16, 8))
    return pl.pallas_call(
        _max9_kernel,
        out_shape=jax.ShapeDtypeStruct((M, C), jnp.bfloat16),
        grid=(M // TM,),
        in_specs=[pl.BlockSpec((TM, C), lambda i: (i, 0)) for _ in range(9)],
        out_specs=pl.BlockSpec((TM, C), lambda i: (i, 0)),
        compiler_params=pltpu.CompilerParams(
            dimension_semantics=("parallel",)),
    )(*slices)


def maxpool_3x3_s2_p1(x):
    B, H, W, C = x.shape
    OH = (H + 2 - 3) // 2 + 1
    OW = (W + 2 - 3) // 2 + 1
    # zero padding is equivalent to -inf padding: input is post-ReLU (>= 0)
    xp = jnp.pad(x, ((0, 0), (1, 1), (1, 1), (0, 0)))
    slices = []
    for i in range(3):
        for j in range(3):
            s = jax.lax.slice(
                xp, (0, i, j, 0),
                (B, i + (OH - 1) * 2 + 1, j + (OW - 1) * 2 + 1, C),
                (1, 2, 2, 1))
            slices.append(s.reshape(B * OH * OW, C))
    out = _max9(*slices)
    return out.reshape(B, OH, OW, C), OH, OW


# ------------------------- avg pool 2x2 s2 (transitions) --------------------
def _avgpool_kernel(x_ref, o_ref, *, c):
    x = x_ref[...].astype(jnp.float32)              # (T, 2, OW, 2c)
    s = jnp.sum(x, axis=1)                          # (T, OW, 2c)
    o_ref[...] = ((s[..., :c] + s[..., c:]) * 0.25).astype(o_ref.dtype)


@jax.jit
def _avgpool_call(xr):
    BOH, _, OW, twoC = xr.shape
    C = twoC // 2
    T = _pick_tile(BOH, (256, 128, 64, 32, 16, 8, 4, 2, 1))
    return pl.pallas_call(
        functools.partial(_avgpool_kernel, c=C),
        out_shape=jax.ShapeDtypeStruct((BOH, OW, C), jnp.bfloat16),
        grid=(BOH // T,),
        in_specs=[pl.BlockSpec((T, 2, OW, twoC), lambda i: (i, 0, 0, 0))],
        out_specs=pl.BlockSpec((T, OW, C), lambda i: (i, 0, 0)),
        compiler_params=pltpu.CompilerParams(
            dimension_semantics=("parallel",)),
    )(xr)


def avgpool_2x2_s2(x):
    B, H, W, C = x.shape
    OH, OW = H // 2, W // 2
    # (B,H,W,C) -> (B*OH, 2, OW, 2C) is a free, contiguous reshape
    out = _avgpool_call(x.reshape(B * OH, 2, OW, 2 * C))
    return out.reshape(B, OH, OW, C), OH, OW


# ----------------- fused norm5 + ReLU + global average pool -----------------
def _bn_relu_gap_kernel(x_ref, s_ref, b_ref, o_ref):
    x = x_ref[...].astype(jnp.float32)              # (B, HW, C)
    x = jnp.maximum(x * s_ref[...] + b_ref[...], 0.0)
    o_ref[...] = jnp.mean(x, axis=1).astype(o_ref.dtype)


@jax.jit
def bn_relu_gap(x, scale, bias):
    B, HW, C = x.shape
    return pl.pallas_call(
        _bn_relu_gap_kernel,
        out_shape=jax.ShapeDtypeStruct((B, C), jnp.bfloat16),
        grid=(1,),
        in_specs=[pl.BlockSpec((B, HW, C), lambda i: (0, 0, 0)),
                  pl.BlockSpec((1, C), lambda i: (0, 0)),
                  pl.BlockSpec((1, C), lambda i: (0, 0))],
        out_specs=pl.BlockSpec((B, C), lambda i: (0, 0)),
    )(x, scale.reshape(1, C).astype(jnp.float32),
      bias.reshape(1, C).astype(jnp.float32))


# ----------------------------- JAX glue (layout) ----------------------------
def im2col(x, kh, kw, stride, pad):
    """x: (B, H, W, C) bf16 NHWC -> ((B*OH*OW, kh*kw*C), OH, OW)."""
    B, H, W, C = x.shape
    OH = (H + 2 * pad - kh) // stride + 1
    OW = (W + 2 * pad - kw) // stride + 1
    xp = jnp.pad(x, ((0, 0), (pad, pad), (pad, pad), (0, 0)))
    cols = []
    for i in range(kh):
        for j in range(kw):
            s = jax.lax.slice(
                xp, (0, i, j, 0),
                (B, i + (OH - 1) * stride + 1, j + (OW - 1) * stride + 1, C),
                (1, stride, stride, 1))
            cols.append(s)
    patches = jnp.concatenate(cols, axis=-1)           # (B, OH, OW, kh*kw*C)
    return patches.reshape(B * OH * OW, kh * kw * C), OH, OW


# ----------------------- parameters (synthetic, deterministic) --------------
def init_params(seed=0, in_dim=1, out_dim=31):
    key = jax.random.PRNGKey(seed)

    def nk():
        nonlocal key
        key, sub = jax.random.split(key)
        return sub

    def conv_w(kh, kw, cin, cout):
        fan_in = kh * kw * cin
        w = (jax.random.normal(nk(), (fan_in, cout), jnp.float32)
             * jnp.sqrt(2.0 / fan_in))
        return w.astype(jnp.bfloat16)

    def bn(c):
        gamma = jax.random.uniform(nk(), (c,), jnp.float32, 0.8, 1.2)
        beta = jax.random.normal(nk(), (c,), jnp.float32) * 0.05
        mean = jax.random.normal(nk(), (c,), jnp.float32) * 0.05
        var = jax.random.uniform(nk(), (c,), jnp.float32, 0.8, 1.2)
        scale = gamma / jnp.sqrt(var + EPS)
        bias = beta - mean * scale
        return scale, bias

    def pad_cols(w, n):
        return jnp.pad(w, ((0, 0), (0, n - w.shape[1])))

    def pad_vec(v, n):
        return jnp.pad(v, (0, n - v.shape[0]))

    params = {'conv0': pad_cols(conv_w(7, 7, in_dim, NUM_INIT), LANE)}
    s0, b0 = bn(NUM_INIT)
    params['norm0'] = (pad_vec(s0, LANE), pad_vec(b0, LANE))
    c = NUM_INIT
    for bi, nl in enumerate(BLOCK_CONFIG):
        for li in range(nl):
            params[f'b{bi}l{li}'] = {
                'norm1': bn(c),
                'conv1': conv_w(1, 1, c, BN_SIZE * GROWTH),
                'norm2': bn(BN_SIZE * GROWTH),
                'conv2': pad_cols(conv_w(3, 3, BN_SIZE * GROWTH, GROWTH), LANE),
            }
            c += GROWTH
        if bi != len(BLOCK_CONFIG) - 1:
            params[f't{bi}'] = {'norm': bn(c), 'conv': conv_w(1, 1, c, c // 2)}
            c //= 2
    params['norm5'] = bn(c)
    cls = (jax.random.normal(nk(), (c, out_dim), jnp.float32)
           * jnp.sqrt(1.0 / c)).astype(jnp.bfloat16)
    params['cls_w'] = pad_cols(cls, _round_up(out_dim, LANE))
    params['cls_b'] = jax.random.normal(nk(), (out_dim,), jnp.float32) * 0.01
    return params


# --------------------------------- forward ---------------------------------
def densenet121_forward(params, x_nchw):
    x = jnp.transpose(x_nchw, (0, 2, 3, 1)).astype(jnp.bfloat16)  # NCHW->NHWC
    B = x.shape[0]

    # stem: conv0 (7x7 s2 p3, no bias) with norm0+relu0 fused as the output
    # epilogue (128-padded channels are exact zeros), then maxpool 3x3 s2 p1.
    cols, H, W = im2col(x, 7, 7, 2, 3)
    y = _mm_post(cols, params['conv0'], *params['norm0'])         # (B*H*W, 128)
    y, H, W = maxpool_3x3_s2_p1(y.reshape(B, H, W, LANE))
    feat = y.reshape(B * H * W, LANE)[:, :NUM_INIT]
    C = NUM_INIT

    for bi, nlayers in enumerate(BLOCK_CONFIG):
        for li in range(nlayers):
            p = params[f'b{bi}l{li}']
            # norm1+relu fused as A-prologue, norm2+relu fused as epilogue
            h = _mm_pre_post(feat, p['conv1'], *p['norm1'], *p['norm2'])
            # conv2 zero-pads its (post-relu) input spatially, as in PyTorch
            cols, _, _ = im2col(h.reshape(B, H, W, BN_SIZE * GROWTH), 3, 3, 1, 1)
            new = _mm_plain(cols, p['conv2'], out_dtype=jnp.bfloat16)  # (M, 128)
            feat = jnp.concatenate([feat, new[:, :GROWTH]], axis=-1)
            C += GROWTH
        if bi != len(BLOCK_CONFIG) - 1:
            p = params[f't{bi}']
            # transition: norm+relu fused into the 1x1 compress matmul
            h = _mm_pre(feat, p['conv'], *p['norm'])
            C //= 2
            hmap, H, W = avgpool_2x2_s2(h.reshape(B, H, W, C))
            feat = hmap.reshape(B * H * W, C)

    # norm5 + relu + adaptive-avg-pool(1,1) fused; (B, HW, C) reshape is free
    pooled = bn_relu_gap(feat.reshape(B, H * W, C), *params['norm5'])  # (B,1024)
    n_cls = params['cls_b'].shape[0]
    logits = _mm_plain(pooled, params['cls_w'], out_dtype=jnp.float32)
    return logits[:, :n_cls] + params['cls_b'][None, :]               # (B, 31)


if __name__ == "__main__":
    params = init_params(seed=0, in_dim=1, out_dim=31)
    # smallest spatial size that survives densenet121's 5 downsamplings
    x = jax.random.normal(jax.random.PRNGKey(0), (2, 1, 32, 32), jnp.float32)
    logits = densenet121_forward(params, x)
    logits = jax.block_until_ready(logits)
    assert logits.shape == (2, 31), logits.shape
    assert bool(jnp.all(jnp.isfinite(logits)))
    print("KERNEL_OK")
</pallas_src>

<mosaic_0001>
module attributes {stable_mosaic.version = 11 : i64} {
  func.func @kernel(%arg0: i32, %arg1: i32, %arg2: i32, %arg3: memref<256x64xbf16, #tpu.memory_space<vmem>>, %arg4: memref<64x128xbf16, #tpu.memory_space<vmem>>, %arg5: memref<1x128xf32, #tpu.memory_space<vmem>>, %arg6: memref<1x128xf32, #tpu.memory_space<vmem>>, %arg7: memref<256x128xbf16, #tpu.memory_space<vmem>>, %arg8: memref<256x128xf32, #tpu.memory_space<vmem>>) attributes {dimension_semantics = [#tpu.dimension_semantics<parallel>, #tpu.dimension_semantics<parallel>, #tpu.dimension_semantics<arbitrary>], iteration_bounds = array<i64: 2, 1, 1>, scalar_prefetch = 0 : i64, scratch_operands = 1 : i64, tpu.core_type = #tpu.core_type<tc>, window_params = [{transform_indices = @transform_0, window_bounds = array<i64: 256, 64>}, {transform_indices = @transform_1, window_bounds = array<i64: 64, 128>}, {transform_indices = @transform_2, window_bounds = array<i64: 1, 128>}, {transform_indices = @transform_3, window_bounds = array<i64: 1, 128>}, {transform_indices = @transform_4, window_bounds = array<i64: 256, 128>}]} {
    %c0_i32 = arith.constant 0 : i32
    %0 = arith.cmpi eq, %arg2, %c0_i32 : i32
    %1 = arith.extui %0 : i1 to i32
    %c0_i32_0 = arith.constant 0 : i32
    %2 = arith.cmpi ne, %1, %c0_i32_0 : i32
    scf.if %2 {
      %cst_10 = arith.constant 0.000000e+00 : f32
      %12 = vector.broadcast %cst_10 : f32 to vector<256x128xf32>
      %c0_11 = arith.constant 0 : index
      %c0_12 = arith.constant 0 : index
      %13 = vector.load %arg8[%c0_11, %c0_12] : memref<256x128xf32, #tpu.memory_space<vmem>>, vector<256x128xf32>
      tpu.vector_store %arg8[%c0_11, %c0_12], %12 {strides = array<i32>} : memref<256x128xf32, #tpu.memory_space<vmem>>, vector<256x128xf32>,
    } else {
    }
    %c0 = arith.constant 0 : index
    %c0_1 = arith.constant 0 : index
    %3 = vector.load %arg3[%c0, %c0_1] : memref<256x64xbf16, #tpu.memory_space<vmem>>, vector<256x64xbf16>
    %c0_2 = arith.constant 0 : index
    %c0_3 = arith.constant 0 : index
    %4 = vector.load %arg8[%c0_2, %c0_3] : memref<256x128xf32, #tpu.memory_space<vmem>>, vector<256x128xf32>
    %c0_4 = arith.constant 0 : index
    %c0_5 = arith.constant 0 : index
    %5 = vector.load %arg4[%c0_4, %c0_5] : memref<64x128xbf16, #tpu.memory_space<vmem>>, vector<64x128xbf16>
    %cst = arith.constant dense<0.000000e+00> : vector<256x128xf32>
    %6 = tpu.matmul %3, %5, %cst {dimension_numbers = #tpu.dot_dimension_numbers<[1], [0], [0], [1], [0, 0, 1, 1], [], []>} : vector<256x64xbf16>, vector<64x128xbf16>, vector<256x128xf32> -> vector<256x128xf32>
    %7 = arith.addf %4, %6 : vector<256x128xf32>
    %c0_6 = arith.constant 0 : index
    %c0_7 = arith.constant 0 : index
    %8 = vector.load %arg8[%c0_6, %c0_7] : memref<256x128xf32, #tpu.memory_space<vmem>>, vector<256x128xf32>
    tpu.vector_store %arg8[%c0_6, %c0_7], %7 {strides = array<i32>} : memref<256x128xf32, #tpu.memory_space<vmem>>, vector<256x128xf32>,
    %c0_i32_8 = arith.constant 0 : i32
    %9 = arith.cmpi eq, %arg2, %c0_i32_8 : i32
    %10 = arith.extui %9 : i1 to i32
    %c0_i32_9 = arith.constant 0 : i32
    %11 = arith.cmpi ne, %10, %c0_i32_9 : i32
    scf.if %11 {
      %c0_10 = arith.constant 0 : index
      %c0_11 = arith.constant 0 : index
      %12 = vector.load %arg8[%c0_10, %c0_11] : memref<256x128xf32, #tpu.memory_space<vmem>>, vector<256x128xf32>
      %c0_12 = arith.constant 0 : index
      %c0_13 = arith.constant 0 : index
      %13 = vector.load %arg5[%c0_12, %c0_13] : memref<1x128xf32, #tpu.memory_space<vmem>>, vector<1x128xf32>
      %14 = vector.broadcast %13 : vector<1x128xf32> to vector<256x128xf32>
      %15 = arith.mulf %12, %14 : vector<256x128xf32>
      %c0_14 = arith.constant 0 : index
      %c0_15 = arith.constant 0 : index
      %16 = vector.load %arg6[%c0_14, %c0_15] : memref<1x128xf32, #tpu.memory_space<vmem>>, vector<1x128xf32>
      %17 = vector.broadcast %16 : vector<1x128xf32> to vector<256x128xf32>
      %18 = arith.addf %15, %17 : vector<256x128xf32>
      %cst_16 = arith.constant 0.000000e+00 : f32
      %19 = vector.broadcast %cst_16 : f32 to vector<256x128xf32>
      %20 = arith.maximumf %18, %19 : vector<256x128xf32>
      %21 = arith.truncf %20 : vector<256x128xf32> to vector<256x128xbf16>
      %c0_17 = arith.constant 0 : index
      %c0_18 = arith.constant 0 : index
      %22 = vector.load %arg7[%c0_17, %c0_18] : memref<256x128xbf16, #tpu.memory_space<vmem>>, vector<256x128xbf16>
      tpu.vector_store %arg7[%c0_17, %c0_18], %21 {strides = array<i32>} : memref<256x128xbf16, #tpu.memory_space<vmem>>, vector<256x128xbf16>,
    } else {
    }
    return
  }
  func.func @transform_0(%arg0: i32, %arg1: i32, %arg2: i32) -> (i32, i32) {
    %c0_i32 = arith.constant 0 : i32
    return %arg0, %arg2 : i32, i32
  }
  func.func @transform_1(%arg0: i32, %arg1: i32, %arg2: i32) -> (i32, i32) {
    %c0_i32 = arith.constant 0 : i32
    return %arg2, %arg1 : i32, i32
  }
  func.func @transform_2(%arg0: i32, %arg1: i32, %arg2: i32) -> (i32, i32) {
    %c0_i32 = arith.constant 0 : i32
    %c0_i32_0 = arith.constant 0 : i32
    return %c0_i32, %arg1 : i32, i32
  }
  func.func @transform_3(%arg0: i32, %arg1: i32, %arg2: i32) -> (i32, i32) {
    %c0_i32 = arith.constant 0 : i32
    %c0_i32_0 = arith.constant 0 : i32
    return %c0_i32, %arg1 : i32, i32
  }
  func.func @transform_4(%arg0: i32, %arg1: i32, %arg2: i32) -> (i32, i32) {
    %c0_i32 = arith.constant 0 : i32
    return %arg0, %arg1 : i32, i32
  }
}

</mosaic_0001>

<llo_original>
// kernel: _mm_post.1
$region0: #{_mm_post.1}
  #allocation0 [shape = 'u32[]', space=smem, size = 0x4, offset = 0x4, fixed_abs, tag = 'smem constant byte address 0x4 - core index']
  #allocation1 [shape = 'u32[144,128]{1,0:T(1,128)}', space=vmem, size = 0x12000, scoped, tag = 'internal scratch']
  #allocation2 [shape = 'f32[256,128]{1,0:T(8,128)}', space=vmem, size = 0x20000, scoped, tag = 'scratch operand']
  %s0 = inlined_call_operand.vmem [shape: bf16[512,64], index: 0, kind: input, shape index: {}]
  %s1 = inlined_call_operand.vmem [shape: bf16[64,128], index: 1, kind: input, shape index: {}]
  %s2 = inlined_call_operand.vmem [shape: f32[1,128], index: 2, kind: input, shape index: {}]
  %s3 = inlined_call_operand.vmem [shape: f32[1,128], index: 3, kind: input, shape index: {}]
  %s4 = inlined_call_operand.hbm [shape: bf16[512,128], index: 4, kind: output, shape index: {}]
  %s5 = sld [smem:[#allocation0]]
  $region57: #{_mm_post.1} parent=0
    _
  %s7 = ssub.s32 1, %s5
  %s8 = scalar_select 0, %s7, %s5
  $region1: #{_mm_post.1} parent=0
    #allocation3 [shape = 'u8[131072]{0}', space=vmem, size = 0x20000, scoped, tag = 'output window, operand 0']
    #allocation4 [shape = 's32[2]{0}', space=sflag, size = 0x8, scoped, tag = 'scoped memory for _mm_post.1']
    %9 = vsyncpa [#allocation4], 0
    %s10 = scalar_lea.sflag [#allocation4], 1
    %11 = vsyncpa %s10, 0
    loop: start=0, step=1, limit=4
    $region2: #{_mm_post.1} parent=1 // loop_pre_header
      _
    $region3: #{_mm_post.1} parent=1 // loop_header
      %s13 = sphi 0, %s17
      %p14 = scmp.ge.s32.totalorder %s13, 4
      %s20 = sphi 0, %s39
      %s21 = sphi 0, %s35
      %s22 = sphi 0, %s31
      %s23 = sphi 0, %s20
      %s24 = sphi 0, %s21
      %s25 = sphi 0, %s22
      %s26 = sphi 0, %s23
      %s27 = sphi 0, %s24
      %s28 = sphi 0, %s25
      %s44 = sphi 0, %s46
      %s47 = sphi 0, %s44
      %s48 = sphi 0, %s47
      %s64 = sphi 0, %s48
      %s72 = sphi 0, %s74
      %s75 = sphi 0, %s72
      %s76 = sphi 0, %s75
      %s92 = sphi 0, %s76
      %s98 = sphi 0, %s100
      %s101 = sphi 0, %s98
      %s102 = sphi 0, %s101
      %s118 = sphi 0, %s102
      %s124 = sphi 0, %s126
      %s127 = sphi 0, %s124
      %s128 = sphi 0, %s127
      %s144 = sphi 0, %s128
      %s152 = sphi 0, %s154
      %s155 = sphi 0, %s152
      %s156 = sphi 0, %s155
      %s172 = sphi 0, %s156
    $region4: #{_mm_post.1} parent=1 // loop_header_branch
      %16 = sbr.rel (%p14) target = $region8
    $region5: #{_mm_post.1} parent=1 // loop_body
      %s18 = ssub.s32 %s13, 1
      %s19 = ssub.s32 %s13, 2
      %s29 = sadd.s32 1, %s22
      %p30 = scmp.ge.s32.totalorder %s29, 1
      %s31 = scalar_select %p30, 0, %s29
      %s32 = sadd.s32 1, %s21
      %s33 = scalar_select %p30, %s32, %s21
      %p34 = scmp.ge.s32.totalorder %s33, 1
      %s35 = scalar_select %p34, 0, %s33
      %s36 = sadd.s32 1, %s20
      %s37 = scalar_select %p34, %s36, %s20
      %p38 = scmp.ge.s32.totalorder %s37, 2
      %s39 = scalar_select %p38, 0, %s37
      %s40 = ssub.s32 %s20, %s39
      %s41 = ssub.s32 %s22, %s31
      %s42 = sor.u32 %s40, %s41
      %p43 = scmp.eq.s32.totalorder %s42, 0
      %s45 = sadd.s32 %s44, 1
      %s46 = scalar_select %p43, %s44, %s45
      %p49 = pneg %p43
      %p50 = scmp.eq.s32.totalorder %s13, 1
      %p51 = por %p49, %p50
      %p52 = scmp.ne.s32.totalorder %s44, %s47
      %p53 = scmp.eq.s32.totalorder %s13, 0
      %p54 = por %p52, %p53
      %p55 = scmp.ne.s32.totalorder %s44, %s47
      %p56 = scmp.eq.s32.totalorder %s18, 1
      %p57 = por %p55, %p56
      %p58 = scmp.ne.s32.totalorder %s47, %s48
      %p59 = scmp.eq.s32.totalorder %s18, 0
      %p60 = por %p58, %p59
      %p61 = scmp.ne.s32.totalorder %s47, %s48
      %p62 = scmp.eq.s32.totalorder %s19, 1
      %p63 = por %p61, %p62
      %p65 = scmp.ne.s32.totalorder %s48, %s64
      %p66 = scmp.eq.s32.totalorder %s19, 0
      %p67 = por %p65, %p66
      %s68 = ssub.s32 %s22, %s31
      %s69 = ssub.s32 %s21, %s35
      %s70 = sor.u32 %s68, %s69
      %p71 = scmp.eq.s32.totalorder %s70, 0
      %s73 = sadd.s32 %s72, 1
      %s74 = scalar_select %p71, %s72, %s73
      %p77 = pneg %p71
      %p78 = scmp.eq.s32.totalorder %s13, 1
      %p79 = por %p77, %p78
      %p80 = scmp.ne.s32.totalorder %s72, %s75
      %p81 = scmp.eq.s32.totalorder %s13, 0
      %p82 = por %p80, %p81
      %p83 = scmp.ne.s32.totalorder %s72, %s75
      %p84 = scmp.eq.s32.totalorder %s18, 1
      %p85 = por %p83, %p84
      %p86 = scmp.ne.s32.totalorder %s75, %s76
      %p87 = scmp.eq.s32.totalorder %s18, 0
      %p88 = por %p86, %p87
      %p89 = scmp.ne.s32.totalorder %s75, %s76
      %p90 = scmp.eq.s32.totalorder %s19, 1
      %p91 = por %p89, %p90
      %p93 = scmp.ne.s32.totalorder %s76, %s92
      %p94 = scmp.eq.s32.totalorder %s19, 0
      %p95 = por %p93, %p94
      %s96 = ssub.s32 %s21, %s35
      %p97 = scmp.eq.s32.totalorder %s96, 0
      %s99 = sadd.s32 %s98, 1
      %s100 = scalar_select %p97, %s98, %s99
      %p103 = pneg %p97
      %p104 = scmp.eq.s32.totalorder %s13, 1
      %p105 = por %p103, %p104
      %p106 = scmp.ne.s32.totalorder %s98, %s101
      %p107 = scmp.eq.s32.totalorder %s13, 0
      %p108 = por %p106, %p107
      %p109 = scmp.ne.s32.totalorder %s98, %s101
      %p110 = scmp.eq.s32.totalorder %s18, 1
      %p111 = por %p109, %p110
      %p112 = scmp.ne.s32.totalorder %s101, %s102
      %p113 = scmp.eq.s32.totalorder %s18, 0
      %p114 = por %p112, %p113
      %p115 = scmp.ne.s32.totalorder %s101, %s102
      %p116 = scmp.eq.s32.totalorder %s19, 1
      %p117 = por %p115, %p116
      %p119 = scmp.ne.s32.totalorder %s102, %s118
      %p120 = scmp.eq.s32.totalorder %s19, 0
      %p121 = por %p119, %p120
      %s122 = ssub.s32 %s21, %s35
      %p123 = scmp.eq.s32.totalorder %s122, 0
      %s125 = sadd.s32 %s124, 1
      %s126 = scalar_select %p123, %s124, %s125
      %p129 = pneg %p123
      %p130 = scmp.eq.s32.totalorder %s13, 1
      %p131 = por %p129, %p130
      %p132 = scmp.ne.s32.totalorder %s124, %s127
      %p133 = scmp.eq.s32.totalorder %s13, 0
      %p134 = por %p132, %p133
      %p135 = scmp.ne.s32.totalorder %s124, %s127
      %p136 = scmp.eq.s32.totalorder %s18, 1
      %p137 = por %p135, %p136
      %p138 = scmp.ne.s32.totalorder %s127, %s128
      %p139 = scmp.eq.s32.totalorder %s18, 0
      %p140 = por %p138, %p139
      %p141 = scmp.ne.s32.totalorder %s127, %s128
      %p142 = scmp.eq.s32.totalorder %s19, 1
      %p143 = por %p141, %p142
      %p145 = scmp.ne.s32.totalorder %s128, %s144
      %p146 = scmp.eq.s32.totalorder %s19, 0
      %p147 = por %p145, %p146
      %s148 = ssub.s32 %s20, %s39
      %s149 = ssub.s32 %s21, %s35
      %s150 = sor.u32 %s148, %s149
      %p151 = scmp.eq.s32.totalorder %s150, 0
      %s153 = sadd.s32 %s152, 1
      %s154 = scalar_select %p151, %s152, %s153
      %p157 = pneg %p151
      %p158 = scmp.eq.s32.totalorder %s13, 1
      %p159 = por %p157, %p158
      %p160 = scmp.ne.s32.totalorder %s152, %s155
      %p161 = scmp.eq.s32.totalorder %s13, 0
      %p162 = por %p160, %p161
      %p163 = scmp.ne.s32.totalorder %s152, %s155
      %p164 = scmp.eq.s32.totalorder %s18, 1
      %p165 = por %p163, %p164
      %p166 = scmp.ne.s32.totalorder %s155, %s156
      %p167 = scmp.eq.s32.totalorder %s18, 0
      %p168 = por %p166, %p167
      %p169 = scmp.ne.s32.totalorder %s155, %s156
      %p170 = scmp.eq.s32.totalorder %s19, 1
      %p171 = por %p169, %p170
      %p173 = scmp.ne.s32.totalorder %s156, %s172
      %p174 = scmp.eq.s32.totalorder %s19, 0
      %p175 = por %p173, %p174
      %p176 = scmp.le.s32.totalorder 1, %s13
      %p177 = scmp.lt.s32.totalorder %s13, 3
      %p178 = pnand %p176, %p177
      %p179 = pneg %p178
      // Predicated region
      $region9: #{_mm_post.1} parent=5 // pred_check
        _
      $region10: #{_mm_post.1} parent=5 // pred_check_branch
        %181 = sbr.rel (%p178) target = $region12
      $region11: #{_mm_post.1} parent=5 // pred_region
        %s182 = ssub.s32 %s13, 1
        // Predicated region
        $region13: #{_mm_post.1} parent=11 // pred_check
          %p183 = pneg %p88
        $region14: #{_mm_post.1} parent=11 // pred_check_branch
          %185 = sbr.rel (%p183) target = $region16
        $region15: #{_mm_post.1} parent=11 // pred_region
          %s186 = smul.u32 8, %s25
          %p187 = scmp.lt.s32.totalorder %s186, 7
          %s188 = scalar_select %p187, %s186, 7
          %p189 = scmp.lt.s32.totalorder %s24, 0
          %s190 = scalar_select %p189, %s24, 0
          %s191 = sadd.s32 %s190, %s188
          %s192 = smul.addr %s191, 4
          %s193 = scalar_lea.vmem %s1, %s192
          %s194 = smul.u32 8, %s25
        $region16: #{_mm_post.1} parent=11 // pred_fallthru
          _
        // Predicated region
        $region17: #{_mm_post.1} parent=11 // pred_check
          %p195 = pneg %p114
        $region18: #{_mm_post.1} parent=11 // pred_check_branch
          %197 = sbr.rel (%p195) target = $region20
        $region19: #{_mm_post.1} parent=11 // pred_region
          %p198 = scmp.lt.s32.totalorder %s24, 0
          %s199 = scalar_select %p198, %s24, 0
          %s200 = scalar_lea.vmem %s2, %s199
        $region20: #{_mm_post.1} parent=11 // pred_fallthru
          _
        // Predicated region
        $region21: #{_mm_post.1} parent=11 // pred_check
          %p201 = pneg %p140
        $region22: #{_mm_post.1} parent=11 // pred_check_branch
          %203 = sbr.rel (%p201) target = $region24
        $region23: #{_mm_post.1} parent=11 // pred_region
          %p204 = scmp.lt.s32.totalorder %s24, 0
          %s205 = scalar_select %p204, %s24, 0
          %s206 = scalar_lea.vmem %s3, %s205
        $region24: #{_mm_post.1} parent=11 // pred_fallthru
          _
      $region12: #{_mm_post.1} parent=5 // pred_fallthru
        _
      %p207 = scmp.lt.s32.totalorder %s13, 2
      // Predicated region
      $region25: #{_mm_post.1} parent=5 // pred_check
        %p208 = pneg %p207
      $region26: #{_mm_post.1} parent=5 // pred_check_branch
        %210 = sbr.rel (%p208) target = $region28
      $region27: #{_mm_post.1} parent=5 // pred_region
        // Predicated region
        $region29: #{_mm_post.1} parent=27 // pred_check
          %p211 = pneg %p54
        $region30: #{_mm_post.1} parent=27 // pred_check_branch
          %213 = sbr.rel (%p211) target = $region32
        $region31: #{_mm_post.1} parent=27 // pred_region
          %s214 = smul.u32 32, %s20
          %p215 = scmp.lt.s32.totalorder %s214, 63
          %s216 = scalar_select %p215, %s214, 63
          %p217 = scmp.lt.s32.totalorder %s22, 0
          %s218 = scalar_select %p217, %s22, 0
          %s219 = sadd.s32 %s218, %s216
          %s220 = smul.addr %s219, 4
          %s221 = scalar_lea.vmem %s0, %s220
          %s222 = smul.u32 32, %s20
        $region32: #{_mm_post.1} parent=27 // pred_fallthru
          _
      $region28: #{_mm_post.1} parent=5 // pred_fallthru
        _
      %p223 = scmp.le.s32.totalorder 1, %s13
      %p224 = scmp.lt.s32.totalorder %s13, 3
      %p225 = pnand %p223, %p224
      %p226 = pneg %p225
      // Predicated region
      $region33: #{_mm_post.1} parent=5 // pred_check
        _
      $region34: #{_mm_post.1} parent=5 // pred_check_branch
        %228 = sbr.rel (%p225) target = $region36
      $region35: #{_mm_post.1} parent=5 // pred_region
        %s229 = ssub.s32 %s13, 1
        %s230 = smul.u32 32, %s23
        %p231 = scmp.lt.s32.totalorder %s230, 63
        %s232 = scalar_select %p231, %s230, 63
        %p233 = scmp.lt.s32.totalorder %s25, 0
        %s234 = scalar_select %p233, %s25, 0
        %s235 = sadd.s32 %s234, %s232
        %s236 = smul.addr %s235, 4
        %s237 = scalar_lea.vmem %s0, %s236
        %p238 = pneg %p60
        %p239 = pneg %p57
        %s240 = smul.u32 8, %s25
        %p241 = scmp.lt.s32.totalorder %s240, 7
        %s242 = scalar_select %p241, %s240, 7
        %p243 = scmp.lt.s32.totalorder %s24, 0
        %s244 = scalar_select %p243, %s24, 0
        %s245 = sadd.s32 %s244, %s242
        %s246 = smul.addr %s245, 4
        %s247 = scalar_lea.vmem %s1, %s246
        %p248 = pneg %p88
        %p249 = pneg %p85
        %p250 = scmp.lt.s32.totalorder %s24, 0
        %s251 = scalar_select %p250, %s24, 0
        %s252 = scalar_lea.vmem %s2, %s251
        %p253 = pneg %p114
        %p254 = pneg %p111
        %p255 = scmp.lt.s32.totalorder %s24, 0
        %s256 = scalar_select %p255, %s24, 0
        %s257 = scalar_lea.vmem %s3, %s256
        %p258 = pneg %p140
        %p259 = pneg %p137
        %p260 = pneg %p168
        %p261 = pneg %p165
        %s262 = sand.u32 %s155, 1
        %s263 = scalar_lea.sflag [#allocation4], %s262
        %s264 = sand.u32 %s155, 1
        %s265 = smul.addr %s264, 128
        %s266 = scalar_lea.vmem [#allocation3], %s265
        %s267 = smul.u32 32, %s23
        %p268 = scmp.lt.s32.totalorder %s267, 63
        %s269 = scalar_select %p268, %s267, 63
        %p270 = scmp.lt.s32.totalorder %s25, 0
        %s271 = scalar_select %p270, %s25, 0
        %s272 = sadd.s32 %s271, %s269
        %s273 = smul.addr %s272, 4
        %s274 = scalar_lea.vmem %s0, %s273
        %s275 = smul.u32 32, %s23
        %s276 = smul.u32 8, %s25
        %p277 = scmp.lt.s32.totalorder %s276, 7
        %s278 = scalar_select %p277, %s276, 7
        %p279 = scmp.lt.s32.totalorder %s24, 0
        %s280 = scalar_select %p279, %s24, 0
        %s281 = sadd.s32 %s280, %s278
        %s282 = smul.addr %s281, 4
        %s283 = scalar_lea.vmem %s1, %s282
        %s284 = smul.u32 8, %s25
        %p285 = scmp.lt.s32.totalorder %s24, 0
        %s286 = scalar_select %p285, %s24, 0
        %s287 = scalar_lea.vmem %s2, %s286
        %p288 = scmp.lt.s32.totalorder %s24, 0
        %s289 = scalar_select %p288, %s24, 0
        %s290 = scalar_lea.vmem %s3, %s289
        %s291 = smul.u32 32, %s23
        %p293 = scmp.eq.s32.totalorder %s25, 0
        // Predicated region
        $region37: #{_mm_post.1} parent=35 // pred_check
          %p294 = pneg %p293
        $region38: #{_mm_post.1} parent=35 // pred_check_branch
          %296 = sbr.rel (%p294) target = $region40
        $region39: #{_mm_post.1} parent=35 // pred_region
          %297 = vst [vmem:[#allocation2] sm:$0xff] 0.0
          %298 = vst [vmem:[#allocation2 + $0x8] sm:$0xff] 0.0
          %299 = vst [vmem:[#allocation2 + $0x10] sm:$0xff] 0.0
          %300 = vst [vmem:[#allocation2 + $0x18] sm:$0xff] 0.0
          %301 = vst [vmem:[#allocation2 + $0x20] sm:$0xff] 0.0
          %302 = vst [vmem:[#allocation2 + $0x28] sm:$0xff] 0.0
          %303 = vst [vmem:[#allocation2 + $0x30] sm:$0xff] 0.0
          %304 = vst [vmem:[#allocation2 + $0x38] sm:$0xff] 0.0
          %305 = vst [vmem:[#allocation2 + $0x40] sm:$0xff] 0.0
          %306 = vst [vmem:[#allocation2 + $0x48] sm:$0xff] 0.0
          %307 = vst [vmem:[#allocation2 + $0x50] sm:$0xff] 0.0
          %308 = vst [vmem:[#allocation2 + $0x58] sm:$0xff] 0.0
          %309 = vst [vmem:[#allocation2 + $0x60] sm:$0xff] 0.0
          %310 = vst [vmem:[#allocation2 + $0x68] sm:$0xff] 0.0
          %311 = vst [vmem:[#allocation2 + $0x70] sm:$0xff] 0.0
          %312 = vst [vmem:[#allocation2 + $0x78] sm:$0xff] 0.0
          %313 = vst [vmem:[#allocation2 + $0x80] sm:$0xff] 0.0
          %314 = vst [vmem:[#allocation2 + $0x88] sm:$0xff] 0.0
          %315 = vst [vmem:[#allocation2 + $0x90] sm:$0xff] 0.0
          %316 = vst [vmem:[#allocation2 + $0x98] sm:$0xff] 0.0
          %317 = vst [vmem:[#allocation2 + $0xa0] sm:$0xff] 0.0
          %318 = vst [vmem:[#allocation2 + $0xa8] sm:$0xff] 0.0
          %319 = vst [vmem:[#allocation2 + $0xb0] sm:$0xff] 0.0
          %320 = vst [vmem:[#allocation2 + $0xb8] sm:$0xff] 0.0
          %321 = vst [vmem:[#allocation2 + $0xc0] sm:$0xff] 0.0
          %322 = vst [vmem:[#allocation2 + $0xc8] sm:$0xff] 0.0
          %323 = vst [vmem:[#allocation2 + $0xd0] sm:$0xff] 0.0
          %324 = vst [vmem:[#allocation2 + $0xd8] sm:$0xff] 0.0
          %325 = vst [vmem:[#allocation2 + $0xe0] sm:$0xff] 0.0
          %326 = vst [vmem:[#allocation2 + $0xe8] sm:$0xff] 0.0
          %327 = vst [vmem:[#allocation2 + $0xf0] sm:$0xff] 0.0
          %328 = vst [vmem:[#allocation2 + $0xf8] sm:$0xff] 0.0
        $region40: #{_mm_post.1} parent=35 // pred_fallthru
          _
        %v329 = vld [vmem:[%s274] sm:$0xf]
        %v330 = vld [vmem:[%s274 + $0x4] sm:$0xf]
        %v331 = vld [vmem:[%s274 + $0x8] sm:$0xf]
        %v332 = vld [vmem:[%s274 + $0xc] sm:$0xf]
        %v333 = vld [vmem:[%s274 + $0x10] sm:$0xf]
        %v334 = vld [vmem:[%s274 + $0x14] sm:$0xf]
        %v335 = vld [vmem:[%s274 + $0x18] sm:$0xf]
        %v336 = vld [vmem:[%s274 + $0x1c] sm:$0xf]
        %v337 = vld [vmem:[%s274 + $0x20] sm:$0xf]
        %v338 = vld [vmem:[%s274 + $0x24] sm:$0xf]
        %v339 = vld [vmem:[%s274 + $0x28] sm:$0xf]
        %v340 = vld [vmem:[%s274 + $0x2c] sm:$0xf]
        %v341 = vld [vmem:[%s274 + $0x30] sm:$0xf]
        %v342 = vld [vmem:[%s274 + $0x34] sm:$0xf]
        %v343 = vld [vmem:[%s274 + $0x38] sm:$0xf]
        %v344 = vld [vmem:[%s274 + $0x3c] sm:$0xf]
        %v345 = vld [vmem:[%s274 + $0x40] sm:$0xf]
        %v346 = vld [vmem:[%s274 + $0x44] sm:$0xf]
        %v347 = vld [vmem:[%s274 + $0x48] sm:$0xf]
        %v348 = vld [vmem:[%s274 + $0x4c] sm:$0xf]
        %v349 = vld [vmem:[%s274 + $0x50] sm:$0xf]
        %v350 = vld [vmem:[%s274 + $0x54] sm:$0xf]
        %v351 = vld [vmem:[%s274 + $0x58] sm:$0xf]
        %v352 = vld [vmem:[%s274 + $0x5c] sm:$0xf]
        %v353 = vld [vmem:[%s274 + $0x60] sm:$0xf]
        %v354 = vld [vmem:[%s274 + $0x64] sm:$0xf]
        %v355 = vld [vmem:[%s274 + $0x68] sm:$0xf]
        %v356 = vld [vmem:[%s274 + $0x6c] sm:$0xf]
        %v357 = vld [vmem:[%s274 + $0x70] sm:$0xf]
        %v358 = vld [vmem:[%s274 + $0x74] sm:$0xf]
        %v359 = vld [vmem:[%s274 + $0x78] sm:$0xf]
        %v360 = vld [vmem:[%s274 + $0x7c] sm:$0xf]
        %v361 = vld [vmem:[#allocation2] sm:$0xff]
        %v362 = vld [vmem:[#allocation2 + $0x8] sm:$0xff]
        %v363 = vld [vmem:[#allocation2 + $0x10] sm:$0xff]
        %v364 = vld [vmem:[#allocation2 + $0x18] sm:$0xff]
        %v365 = vld [vmem:[#allocation2 + $0x20] sm:$0xff]
        %v366 = vld [vmem:[#allocation2 + $0x28] sm:$0xff]
        %v367 = vld [vmem:[#allocation2 + $0x30] sm:$0xff]
        %v368 = vld [vmem:[#allocation2 + $0x38] sm:$0xff]
        %v369 = vld [vmem:[#allocation2 + $0x40] sm:$0xff]
        %v370 = vld [vmem:[#allocation2 + $0x48] sm:$0xff]
        %v371 = vld [vmem:[#allocation2 + $0x50] sm:$0xff]
        %v372 = vld [vmem:[#allocation2 + $0x58] sm:$0xff]
        %v373 = vld [vmem:[#allocation2 + $0x60] sm:$0xff]
        %v374 = vld [vmem:[#allocation2 + $0x68] sm:$0xff]
        %v375 = vld [vmem:[#allocation2 + $0x70] sm:$0xff]
        %v376 = vld [vmem:[#allocation2 + $0x78] sm:$0xff]
        %v377 = vld [vmem:[#allocation2 + $0x80] sm:$0xff]
        %v378 = vld [vmem:[#allocation2 + $0x88] sm:$0xff]
        %v379 = vld [vmem:[#allocation2 + $0x90] sm:$0xff]
        %v380 = vld [vmem:[#allocation2 + $0x98] sm:$0xff]
        %v381 = vld [vmem:[#allocation2 + $0xa0] sm:$0xff]
        %v382 = vld [vmem:[#allocation2 + $0xa8] sm:$0xff]
        %v383 = vld [vmem:[#allocation2 + $0xb0] sm:$0xff]
        %v384 = vld [vmem:[#allocation2 + $0xb8] sm:$0xff]
        %v385 = vld [vmem:[#allocation2 + $0xc0] sm:$0xff]
        %v386 = vld [vmem:[#allocation2 + $0xc8] sm:$0xff]
        %v387 = vld [vmem:[#allocation2 + $0xd0] sm:$0xff]
        %v388 = vld [vmem:[#allocation2 + $0xd8] sm:$0xff]
        %v389 = vld [vmem:[#allocation2 + $0xe0] sm:$0xff]
        %v390 = vld [vmem:[#allocation2 + $0xe8] sm:$0xff]
        %v391 = vld [vmem:[#allocation2 + $0xf0] sm:$0xff]
        %v392 = vld [vmem:[#allocation2 + $0xf8] sm:$0xff]
        %v393 = vld [vmem:[%s283] sm:$0xf]
        %v394 = vld [vmem:[%s283 + $0x4] sm:$0xf]
        %v395 = vld [vmem:[%s283 + $0x8] sm:$0xf]
        %v396 = vld [vmem:[%s283 + $0xc] sm:$0xf]
        %v397 = vld [vmem:[%s283 + $0x10] sm:$0xf]
        %v398 = vld [vmem:[%s283 + $0x14] sm:$0xf]
        %v399 = vld [vmem:[%s283 + $0x18] sm:$0xf]
        %v400 = vld [vmem:[%s283 + $0x1c] sm:$0xf]
        %v433 = vunpack.c.l.b16 %v329
        %v434 = vunpack.c.l.b16 %v330
        %v435 = vunpack.c.l.b16 %v331
        %v436 = vunpack.c.l.b16 %v332
        %v437 = vunpack.c.l.b16 %v333
        %v438 = vunpack.c.l.b16 %v334
        %v439 = vunpack.c.l.b16 %v335
        %v440 = vunpack.c.l.b16 %v336
        %v441 = vunpack.c.l.b16 %v337
        %v442 = vunpack.c.l.b16 %v338
        %v443 = vunpack.c.l.b16 %v339
        %v444 = vunpack.c.l.b16 %v340
        %v445 = vunpack.c.l.b16 %v341
        %v446 = vunpack.c.l.b16 %v342
        %v447 = vunpack.c.l.b16 %v343
        %v448 = vunpack.c.l.b16 %v344
        %v449 = vunpack.c.l.b16 %v345
        %v450 = vunpack.c.l.b16 %v346
        %v451 = vunpack.c.l.b16 %v347
        %v452 = vunpack.c.l.b16 %v348
        %v453 = vunpack.c.l.b16 %v349
        %v454 = vunpack.c.l.b16 %v350
        %v455 = vunpack.c.l.b16 %v351
        %v456 = vunpack.c.l.b16 %v352
        %v457 = vunpack.c.l.b16 %v353
        %v458 = vunpack.c.l.b16 %v354
        %v459 = vunpack.c.l.b16 %v355
        %v460 = vunpack.c.l.b16 %v356
        %v461 = vunpack.c.l.b16 %v357
        %v462 = vunpack.c.l.b16 %v358
        %v463 = vunpack.c.l.b16 %v359
        %v464 = vunpack.c.l.b16 %v360
        %v465 = vpack.c.b16 %v434, %v433
        %v466 = vpack.c.b16 %v436, %v435
        %v467 = vpack.c.b16 %v438, %v437
        %v468 = vpack.c.b16 %v440, %v439
        %v469 = vpack.c.b16 %v442, %v441
        %v470 = vpack.c.b16 %v444, %v443
        %v471 = vpack.c.b16 %v446, %v445
        %v472 = vpack.c.b16 %v448, %v447
        %v473 = vpack.c.b16 %v450, %v449
        %v474 = vpack.c.b16 %v452, %v451
        %v475 = vpack.c.b16 %v454, %v453
        %v476 = vpack.c.b16 %v456, %v455
        %v477 = vpack.c.b16 %v458, %v457
        %v478 = vpack.c.b16 %v460, %v459
        %v479 = vpack.c.b16 %v462, %v461
        %v480 = vpack.c.b16 %v464, %v463
        %v489 = vunpack.c.l.b16 %v393
        %v490 = vunpack.c.l.b16 %v394
        %v491 = vunpack.c.l.b16 %v395
        %v492 = vunpack.c.l.b16 %v396
        %v493 = vunpack.c.l.b16 %v397
        %v494 = vunpack.c.l.b16 %v398
        %v495 = vunpack.c.l.b16 %v399
        %v496 = vunpack.c.l.b16 %v400
        %v497 = vpack.c.b16 %v490, %v489
        %v498 = vpack.c.b16 %v492, %v491
        %v499 = vpack.c.b16 %v494, %v493
        %v500 = vpack.c.b16 %v496, %v495
        %vm505 = vcmask 523264
        %v507 = vsel %vm505, %v465, 0
        %v510 = vsel %vm505, %v466, 0
        %v513 = vsel %vm505, %v467, 0
        %v516 = vsel %vm505, %v468, 0
        %v519 = vsel %vm505, %v469, 0
        %v522 = vsel %vm505, %v470, 0
        %v525 = vsel %vm505, %v471, 0
        %v528 = vsel %vm505, %v472, 0
        %v531 = vsel %vm505, %v473, 0
        %v534 = vsel %vm505, %v474, 0
        %v537 = vsel %vm505, %v475, 0
        %v540 = vsel %vm505, %v476, 0
        %v543 = vsel %vm505, %v477, 0
        %v546 = vsel %vm505, %v478, 0
        %v549 = vsel %vm505, %v479, 0
        %v552 = vsel %vm505, %v480, 0
        %554 = vmatprep.subr.bf16.mxu0 0
        %555 = vmatpush1.bf16.msra.mxu0 %v497
        %556 = vmatprep.subr.bf16.mxu0 0
        %557 = vmatpush1.bf16.msra.mxu0 %v498
        %558 = vmatprep.subr.bf16.mxu0 0
        %559 = vmatpush1.bf16.msra.mxu0 %v499
        %560 = vmatprep.subr.bf16.mxu0 0
        %561 = vmatpush1.bf16.msra.mxu0 %v500
        %562 = vmatprep.subr.bf16.mxu0 0
        %563 = vmatpush1.bf16.msra.mxu0 0
        %564 = vmatprep.subr.bf16.mxu0 0
        %565 = vmatpush1.bf16.msra.mxu0 0
        %566 = vmatprep.subr.bf16.mxu0 0
        %567 = vmatpush1.bf16.msra.mxu0 0
        %568 = vmatprep.subr.bf16.mxu0 0
        %569 = vmatpush1.bf16.msra.mxu0 0
        %570 = vmatprep.subr.bf16.mxu0 0
        %571 = vmatpush1.bf16.msra.mxu0 0
        %572 = vmatprep.subr.bf16.mxu0 0
        %573 = vmatpush1.bf16.msra.mxu0 0
        %574 = vmatprep.subr.bf16.mxu0 0
        %575 = vmatpush1.bf16.msra.mxu0 0
        %576 = vmatprep.subr.bf16.mxu0 0
        %577 = vmatpush1.bf16.msra.mxu0 0
        %578 = vmatprep.subr.bf16.mxu0 0
        %579 = vmatpush1.bf16.msra.mxu0 0
        %580 = vmatprep.subr.bf16.mxu0 0
        %581 = vmatpush1.bf16.msra.mxu0 0
        %582 = vmatprep.subr.bf16.mxu0 0
        %583 = vmatpush1.bf16.msra.mxu0 0
        %584 = vmatprep.subr.bf16.mxu0 0
        %585 = vmatpush1.bf16.msra.mxu0 0
        %586 = vmatprep.mubr.bf16.mxu0 0
        %587 = vmatmul.mubr.bf16.gmra.mrb[0].mxu0 %v507
        %v588 = vpop.f32.mrb[0].mxu0
        %v589 = vadd.f32 0.0, %v588
        %v590 = vpop.f32.mrb[0].mxu0
        %v591 = vpop.f32.mrb[0].mxu0
        %v592 = vadd.f32 0.0, %v591
        %v593 = vpop.f32.mrb[0].mxu0
        %594 = vmatprep.mubr.bf16.mxu0 0
        %595 = vmatmul.mubr.bf16.gmra.mrb[0].mxu0 %v510
        %v596 = vpop.f32.mrb[0].mxu0
        %v597 = vadd.f32 0.0, %v596
        %v598 = vpop.f32.mrb[0].mxu0
        %v599 = vpop.f32.mrb[0].mxu0
        %v600 = vadd.f32 0.0, %v599
        %v601 = vpop.f32.mrb[0].mxu0
        %602 = vmatprep.mubr.bf16.mxu0 0
        %603 = vmatmul.mubr.bf16.gmra.mrb[0].mxu0 %v513
        %v604 = vpop.f32.mrb[0].mxu0
        %v605 = vadd.f32 0.0, %v604
        %v606 = vpop.f32.mrb[0].mxu0
        %v607 = vpop.f32.mrb[0].mxu0
        %v608 = vadd.f32 0.0, %v607
        %v609 = vpop.f32.mrb[0].mxu0
        %610 = vmatprep.mubr.bf16.mxu0 0
        %611 = vmatmul.mubr.bf16.gmra.mrb[0].mxu0 %v516
        %v612 = vpop.f32.mrb[0].mxu0
        %v613 = vadd.f32 0.0, %v612
        %v614 = vpop.f32.mrb[0].mxu0
        %v615 = vpop.f32.mrb[0].mxu0
        %v616 = vadd.f32 0.0, %v615
        %v617 = vpop.f32.mrb[0].mxu0
        %618 = vmatprep.mubr.bf16.mxu0 0
        %619 = vmatmul.mubr.bf16.gmra.mrb[0].mxu0 %v519
        %v620 = vpop.f32.mrb[0].mxu0
        %v621 = vadd.f32 0.0, %v620
        %v622 = vpop.f32.mrb[0].mxu0
        %v623 = vpop.f32.mrb[0].mxu0
        %v624 = vadd.f32 0.0, %v623
        %v625 = vpop.f32.mrb[0].mxu0
        %626 = vmatprep.mubr.bf16.mxu0 0
        %627 = vmatmul.mubr.bf16.gmra.mrb[0].mxu0 %v522
        %v628 = vpop.f32.mrb[0].mxu0
        %v629 = vadd.f32 0.0, %v628
        %v630 = vpop.f32.mrb[0].mxu0
        %v631 = vpop.f32.mrb[0].mxu0
        %v632 = vadd.f32 0.0, %v631
        %v633 = vpop.f32.mrb[0].mxu0
        %634 = vmatprep.mubr.bf16.mxu0 0
        %635 = vmatmul.mubr.bf16.gmra.mrb[0].mxu0 %v525
        %v636 = vpop.f32.mrb[0].mxu0
        %v637 = vadd.f32 0.0, %v636
        %v638 = vpop.f32.mrb[0].mxu0
        %v639 = vpop.f32.mrb[0].mxu0
        %v640 = vadd.f32 0.0, %v639
        %v641 = vpop.f32.mrb[0].mxu0
        %642 = vmatprep.mubr.bf16.mxu0 0
        %643 = vmatmul.mubr.bf16.gmra.mrb[0].mxu0 %v528
        %v644 = vpop.f32.mrb[0].mxu0
        %v645 = vadd.f32 0.0, %v644
        %v646 = vpop.f32.mrb[0].mxu0
        %v647 = vpop.f32.mrb[0].mxu0
        %v648 = vadd.f32 0.0, %v647
        %v649 = vpop.f32.mrb[0].mxu0
        %650 = vmatprep.mubr.bf16.mxu0 0
        %651 = vmatmul.mubr.bf16.gmra.mrb[0].mxu0 %v531
        %v652 = vpop.f32.mrb[0].mxu0
        %v653 = vadd.f32 0.0, %v652
        %v654 = vpop.f32.mrb[0].mxu0
        %v655 = vpop.f32.mrb[0].mxu0
        %v656 = vadd.f32 0.0, %v655
        %v657 = vpop.f32.mrb[0].mxu0
        %658 = vmatprep.mubr.bf16.mxu0 0
        %659 = vmatmul.mubr.bf16.gmra.mrb[0].mxu0 %v534
        %v660 = vpop.f32.mrb[0].mxu0
        %v661 = vadd.f32 0.0, %v660
        %v662 = vpop.f32.mrb[0].mxu0
        %v663 = vpop.f32.mrb[0].mxu0
        %v664 = vadd.f32 0.0, %v663
        %v665 = vpop.f32.mrb[0].mxu0
        %666 = vmatprep.mubr.bf16.mxu0 0
        %667 = vmatmul.mubr.bf16.gmra.mrb[0].mxu0 %v537
        %v668 = vpop.f32.mrb[0].mxu0
        %v669 = vadd.f32 0.0, %v668
        %v670 = vpop.f32.mrb[0].mxu0
        %v671 = vpop.f32.mrb[0].mxu0
        %v672 = vadd.f32 0.0, %v671
        %v673 = vpop.f32.mrb[0].mxu0
        %674 = vmatprep.mubr.bf16.mxu0 0
        %675 = vmatmul.mubr.bf16.gmra.mrb[0].mxu0 %v540
        %v676 = vpop.f32.mrb[0].mxu0
        %v677 = vadd.f32 0.0, %v676
        %v678 = vpop.f32.mrb[0].mxu0
        %v679 = vpop.f32.mrb[0].mxu0
        %v680 = vadd.f32 0.0, %v679
        %v681 = vpop.f32.mrb[0].mxu0
        %682 = vmatprep.mubr.bf16.mxu0 0
        %683 = vmatmul.mubr.bf16.gmra.mrb[0].mxu0 %v543
        %v684 = vpop.f32.mrb[0].mxu0
        %v685 = vadd.f32 0.0, %v684
        %v686 = vpop.f32.mrb[0].mxu0
        %v687 = vpop.f32.mrb[0].mxu0
        %v688 = vadd.f32 0.0, %v687
        %v689 = vpop.f32.mrb[0].mxu0
        %690 = vmatprep.mubr.bf16.mxu0 0
        %691 = vmatmul.mubr.bf16.gmra.mrb[0].mxu0 %v546
        %v692 = vpop.f32.mrb[0].mxu0
        %v693 = vadd.f32 0.0, %v692
        %v694 = vpop.f32.mrb[0].mxu0
        %v695 = vpop.f32.mrb[0].mxu0
        %v696 = vadd.f32 0.0, %v695
        %v697 = vpop.f32.mrb[0].mxu0
        %698 = vmatprep.mubr.bf16.mxu0 0
        %699 = vmatmul.mubr.bf16.gmra.mrb[0].mxu0 %v549
        %v700 = vpop.f32.mrb[0].mxu0
        %v701 = vadd.f32 0.0, %v700
        %v702 = vpop.f32.mrb[0].mxu0
        %v703 = vpop.f32.mrb[0].mxu0
        %v704 = vadd.f32 0.0, %v703
        %v705 = vpop.f32.mrb[0].mxu0
        %706 = vmatprep.mubr.bf16.mxu0 0
        %707 = vmatmul.mubr.bf16.gmra.mrb[0].mxu0 %v552
        %v708 = vpop.f32.mrb[0].mxu0
        %v709 = vadd.f32 0.0, %v708
        %v710 = vpop.f32.mrb[0].mxu0
        %v711 = vpop.f32.mrb[0].mxu0
        %v712 = vadd.f32 0.0, %v711
        %v713 = vpop.f32.mrb[0].mxu0
        %714 = vdwg.mxu0
        %v715 = vadd.f32 %v361, %v589
        %v716 = vadd.f32 %v362, %v592
        %v717 = vadd.f32 %v363, %v597
        %v718 = vadd.f32 %v364, %v600
        %v719 = vadd.f32 %v365, %v605
        %v720 = vadd.f32 %v366, %v608
        %v721 = vadd.f32 %v367, %v613
        %v722 = vadd.f32 %v368, %v616
        %v723 = vadd.f32 %v369, %v621
        %v724 = vadd.f32 %v370, %v624
        %v725 = vadd.f32 %v371, %v629
        %v726 = vadd.f32 %v372, %v632
        %v727 = vadd.f32 %v373, %v637
        %v728 = vadd.f32 %v374, %v640
        %v729 = vadd.f32 %v375, %v645
        %v730 = vadd.f32 %v376, %v648
        %v731 = vadd.f32 %v377, %v653
        %v732 = vadd.f32 %v378, %v656
        %v733 = vadd.f32 %v379, %v661
        %v734 = vadd.f32 %v380, %v664
        %v735 = vadd.f32 %v381, %v669
        %v736 = vadd.f32 %v382, %v672
        %v737 = vadd.f32 %v383, %v677
        %v738 = vadd.f32 %v384, %v680
        %v739 = vadd.f32 %v385, %v685
        %v740 = vadd.f32 %v386, %v688
        %v741 = vadd.f32 %v387, %v693
        %v742 = vadd.f32 %v388, %v696
        %v743 = vadd.f32 %v389, %v701
        %v744 = vadd.f32 %v390, %v704
        %v745 = vadd.f32 %v391, %v709
        %v746 = vadd.f32 %v392, %v712
        %747 = vst [vmem:[#allocation2] sm:$0xff] %v715
        %748 = vst [vmem:[#allocation2 + $0x8] sm:$0xff] %v716
        %749 = vst [vmem:[#allocation2 + $0x10] sm:$0xff] %v717
        %750 = vst [vmem:[#allocation2 + $0x18] sm:$0xff] %v718
        %751 = vst [vmem:[#allocation2 + $0x20] sm:$0xff] %v719
        %752 = vst [vmem:[#allocation2 + $0x28] sm:$0xff] %v720
        %753 = vst [vmem:[#allocation2 + $0x30] sm:$0xff] %v721
        %754 = vst [vmem:[#allocation2 + $0x38] sm:$0xff] %v722
        %755 = vst [vmem:[#allocation2 + $0x40] sm:$0xff] %v723
        %756 = vst [vmem:[#allocation2 + $0x48] sm:$0xff] %v724
        %757 = vst [vmem:[#allocation2 + $0x50] sm:$0xff] %v725
        %758 = vst [vmem:[#allocation2 + $0x58] sm:$0xff] %v726
        %759 = vst [vmem:[#allocation2 + $0x60] sm:$0xff] %v727
        %760 = vst [vmem:[#allocation2 + $0x68] sm:$0xff] %v728
        %761 = vst [vmem:[#allocation2 + $0x70] sm:$0xff] %v729
        %762 = vst [vmem:[#allocation2 + $0x78] sm:$0xff] %v730
        %763 = vst [vmem:[#allocation2 + $0x80] sm:$0xff] %v731
        %764 = vst [vmem:[#allocation2 + $0x88] sm:$0xff] %v732
        %765 = vst [vmem:[#allocation2 + $0x90] sm:$0xff] %v733
        %766 = vst [vmem:[#allocation2 + $0x98] sm:$0xff] %v734
        %767 = vst [vmem:[#allocation2 + $0xa0] sm:$0xff] %v735
        %768 = vst [vmem:[#allocation2 + $0xa8] sm:$0xff] %v736
        %769 = vst [vmem:[#allocation2 + $0xb0] sm:$0xff] %v737
        %770 = vst [vmem:[#allocation2 + $0xb8] sm:$0xff] %v738
        %771 = vst [vmem:[#allocation2 + $0xc0] sm:$0xff] %v739
        %772 = vst [vmem:[#allocation2 + $0xc8] sm:$0xff] %v740
        %773 = vst [vmem:[#allocation2 + $0xd0] sm:$0xff] %v741
        %774 = vst [vmem:[#allocation2 + $0xd8] sm:$0xff] %v742
        %775 = vst [vmem:[#allocation2 + $0xe0] sm:$0xff] %v743
        %776 = vst [vmem:[#allocation2 + $0xe8] sm:$0xff] %v744
        %777 = vst [vmem:[#allocation2 + $0xf0] sm:$0xff] %v745
        %778 = vst [vmem:[#allocation2 + $0xf8] sm:$0xff] %v746
        // Predicated region
        $region41: #{_mm_post.1} parent=35 // pred_check
          %p779 = pneg %p293
        $region42: #{_mm_post.1} parent=35 // pred_check_branch
          %781 = sbr.rel (%p779) target = $region44
        $region43: #{_mm_post.1} parent=35 // pred_region
          %v782 = vld [vmem:[#allocation2] sm:$0xff]
          %v783 = vld [vmem:[#allocation2 + $0x8] sm:$0xff]
          %v784 = vld [vmem:[#allocation2 + $0x10] sm:$0xff]
          %v785 = vld [vmem:[#allocation2 + $0x18] sm:$0xff]
          %v786 = vld [vmem:[#allocation2 + $0x20] sm:$0xff]
          %v787 = vld [vmem:[#allocation2 + $0x28] sm:$0xff]
          %v788 = vld [vmem:[#allocation2 + $0x30] sm:$0xff]
          %v789 = vld [vmem:[#allocation2 + $0x38] sm:$0xff]
          %v790 = vld [vmem:[#allocation2 + $0x40] sm:$0xff]
          %v791 = vld [vmem:[#allocation2 + $0x48] sm:$0xff]
          %v792 = vld [vmem:[#allocation2 + $0x50] sm:$0xff]
          %v793 = vld [vmem:[#allocation2 + $0x58] sm:$0xff]
          %v794 = vld [vmem:[#allocation2 + $0x60] sm:$0xff]
          %v795 = vld [vmem:[#allocation2 + $0x68] sm:$0xff]
          %v796 = vld [vmem:[#allocation2 + $0x70] sm:$0xff]
          %v797 = vld [vmem:[#allocation2 + $0x78] sm:$0xff]
          %v798 = vld [vmem:[#allocation2 + $0x80] sm:$0xff]
          %v799 = vld [vmem:[#allocation2 + $0x88] sm:$0xff]
          %v800 = vld [vmem:[#allocation2 + $0x90] sm:$0xff]
          %v801 = vld [vmem:[#allocation2 + $0x98] sm:$0xff]
          %v802 = vld [vmem:[#allocation2 + $0xa0] sm:$0xff]
          %v803 = vld [vmem:[#allocation2 + $0xa8] sm:$0xff]
          %v804 = vld [vmem:[#allocation2 + $0xb0] sm:$0xff]
          %v805 = vld [vmem:[#allocation2 + $0xb8] sm:$0xff]
          %v806 = vld [vmem:[#allocation2 + $0xc0] sm:$0xff]
          %v807 = vld [vmem:[#allocation2 + $0xc8] sm:$0xff]
          %v808 = vld [vmem:[#allocation2 + $0xd0] sm:$0xff]
          %v809 = vld [vmem:[#allocation2 + $0xd8] sm:$0xff]
          %v810 = vld [vmem:[#allocation2 + $0xe0] sm:$0xff]
          %v811 = vld [vmem:[#allocation2 + $0xe8] sm:$0xff]
          %v812 = vld [vmem:[#allocation2 + $0xf0] sm:$0xff]
          %v813 = vld [vmem:[#allocation2 + $0xf8] sm:$0xff]
          %v814 = vld [vmem:[%s287] sm:$0x1]
          %v816 = vlaneseq
          %v817 = vshrl.u32 %v816, 7
          %v818 = vsub.s32 0, %v817
          %v819 = vrot.slane %v814, %v818
          %v821 = vmul.f32 %v782, %v819
          %v822 = vmul.f32 %v783, %v819
          %v823 = vmul.f32 %v784, %v819
          %v824 = vmul.f32 %v785, %v819
          %v825 = vmul.f32 %v786, %v819
          %v826 = vmul.f32 %v787, %v819
          %v827 = vmul.f32 %v788, %v819
          %v828 = vmul.f32 %v789, %v819
          %v829 = vmul.f32 %v790, %v819
          %v830 = vmul.f32 %v791, %v819
          %v831 = vmul.f32 %v792, %v819
          %v832 = vmul.f32 %v793, %v819
          %v833 = vmul.f32 %v794, %v819
          %v834 = vmul.f32 %v795, %v819
          %v835 = vmul.f32 %v796, %v819
          %v836 = vmul.f32 %v797, %v819
          %v837 = vmul.f32 %v798, %v819
          %v838 = vmul.f32 %v799, %v819
          %v839 = vmul.f32 %v800, %v819
          %v840 = vmul.f32 %v801, %v819
          %v841 = vmul.f32 %v802, %v819
          %v842 = vmul.f32 %v803, %v819
          %v843 = vmul.f32 %v804, %v819
          %v844 = vmul.f32 %v805, %v819
          %v845 = vmul.f32 %v806, %v819
          %v846 = vmul.f32 %v807, %v819
          %v847 = vmul.f32 %v808, %v819
          %v848 = vmul.f32 %v809, %v819
          %v849 = vmul.f32 %v810, %v819
          %v850 = vmul.f32 %v811, %v819
          %v851 = vmul.f32 %v812, %v819
          %v852 = vmul.f32 %v813, %v819
          %v853 = vld [vmem:[%s290] sm:$0x1]
          %v855 = vlaneseq
          %v856 = vshrl.u32 %v855, 7
          %v857 = vsub.s32 0, %v856
          %v858 = vrot.slane %v853, %v857
          %v860 = vadd.f32 %v821, %v858
          %v861 = vadd.f32 %v822, %v858
          %v862 = vadd.f32 %v823, %v858
          %v863 = vadd.f32 %v824, %v858
          %v864 = vadd.f32 %v825, %v858
          %v865 = vadd.f32 %v826, %v858
          %v866 = vadd.f32 %v827, %v858
          %v867 = vadd.f32 %v828, %v858
          %v868 = vadd.f32 %v829, %v858
          %v869 = vadd.f32 %v830, %v858
          %v870 = vadd.f32 %v831, %v858
          %v871 = vadd.f32 %v832, %v858
          %v872 = vadd.f32 %v833, %v858
          %v873 = vadd.f32 %v834, %v858
          %v874 = vadd.f32 %v835, %v858
          %v875 = vadd.f32 %v836, %v858
          %v876 = vadd.f32 %v837, %v858
          %v877 = vadd.f32 %v838, %v858
          %v878 = vadd.f32 %v839, %v858
          %v879 = vadd.f32 %v840, %v858
          %v880 = vadd.f32 %v841, %v858
          %v881 = vadd.f32 %v842, %v858
          %v882 = vadd.f32 %v843, %v858
          %v883 = vadd.f32 %v844, %v858
          %v884 = vadd.f32 %v845, %v858
          %v885 = vadd.f32 %v846, %v858
          %v886 = vadd.f32 %v847, %v858
          %v887 = vadd.f32 %v848, %v858
          %v888 = vadd.f32 %v849, %v858
          %v889 = vadd.f32 %v850, %v858
          %v890 = vadd.f32 %v851, %v858
          %v891 = vadd.f32 %v852, %v858
          %v892 = vmax.f32 %v860, 0.0
          %v893 = vmax.f32 %v861, 0.0
          %v894 = vmax.f32 %v862, 0.0
          %v895 = vmax.f32 %v863, 0.0
          %v896 = vmax.f32 %v864, 0.0
          %v897 = vmax.f32 %v865, 0.0
          %v898 = vmax.f32 %v866, 0.0
          %v899 = vmax.f32 %v867, 0.0
          %v900 = vmax.f32 %v868, 0.0
          %v901 = vmax.f32 %v869, 0.0
          %v902 = vmax.f32 %v870, 0.0
          %v903 = vmax.f32 %v871, 0.0
          %v904 = vmax.f32 %v872, 0.0
          %v905 = vmax.f32 %v873, 0.0
          %v906 = vmax.f32 %v874, 0.0
          %v907 = vmax.f32 %v875, 0.0
          %v908 = vmax.f32 %v876, 0.0
          %v909 = vmax.f32 %v877, 0.0
          %v910 = vmax.f32 %v878, 0.0
          %v911 = vmax.f32 %v879, 0.0
          %v912 = vmax.f32 %v880, 0.0
          %v913 = vmax.f32 %v881, 0.0
          %v914 = vmax.f32 %v882, 0.0
          %v915 = vmax.f32 %v883, 0.0
          %v916 = vmax.f32 %v884, 0.0
          %v917 = vmax.f32 %v885, 0.0
          %v918 = vmax.f32 %v886, 0.0
          %v919 = vmax.f32 %v887, 0.0
          %v920 = vmax.f32 %v888, 0.0
          %v921 = vmax.f32 %v889, 0.0
          %v922 = vmax.f32 %v890, 0.0
          %v923 = vmax.f32 %v891, 0.0
          %v924 = vpack.c.bf16 %v893, %v892
          %v925 = vpack.c.bf16 %v895, %v894
          %v926 = vpack.c.bf16 %v897, %v896
          %v927 = vpack.c.bf16 %v899, %v898
          %v928 = vpack.c.bf16 %v901, %v900
          %v929 = vpack.c.bf16 %v903, %v902
          %v930 = vpack.c.bf16 %v905, %v904
          %v931 = vpack.c.bf16 %v907, %v906
          %v932 = vpack.c.bf16 %v909, %v908
          %v933 = vpack.c.bf16 %v911, %v910
          %v934 = vpack.c.bf16 %v913, %v912
          %v935 = vpack.c.bf16 %v915, %v914
          %v936 = vpack.c.bf16 %v917, %v916
          %v937 = vpack.c.bf16 %v919, %v918
          %v938 = vpack.c.bf16 %v921, %v920
          %v939 = vpack.c.bf16 %v923, %v922
          %v956 = vunpack.c.l.b16 %v924
          %v957 = vunpack.c.h.b16 %v924
          %v958 = vunpack.c.l.b16 %v925
          %v959 = vunpack.c.h.b16 %v925
          %v960 = vunpack.c.l.b16 %v926
          %v961 = vunpack.c.h.b16 %v926
          %v962 = vunpack.c.l.b16 %v927
          %v963 = vunpack.c.h.b16 %v927
          %v964 = vunpack.c.l.b16 %v928
          %v965 = vunpack.c.h.b16 %v928
          %v966 = vunpack.c.l.b16 %v929
          %v967 = vunpack.c.h.b16 %v929
          %v968 = vunpack.c.l.b16 %v930
          %v969 = vunpack.c.h.b16 %v930
          %v970 = vunpack.c.l.b16 %v931
          %v971 = vunpack.c.h.b16 %v931
          %v972 = vunpack.c.l.b16 %v932
          %v973 = vunpack.c.h.b16 %v932
          %v974 = vunpack.c.l.b16 %v933
          %v975 = vunpack.c.h.b16 %v933
          %v976 = vunpack.c.l.b16 %v934
          %v977 = vunpack.c.h.b16 %v934
          %v978 = vunpack.c.l.b16 %v935
          %v979 = vunpack.c.h.b16 %v935
          %v980 = vunpack.c.l.b16 %v936
          %v981 = vunpack.c.h.b16 %v936
          %v982 = vunpack.c.l.b16 %v937
          %v983 = vunpack.c.h.b16 %v937
          %v984 = vunpack.c.l.b16 %v938
          %v985 = vunpack.c.h.b16 %v938
          %v986 = vunpack.c.l.b16 %v939
          %v987 = vunpack.c.h.b16 %v939
          %v988 = vpack.c.b16 %v956, %v956
          %v989 = vpack.c.b16 %v957, %v957
          %v990 = vpack.c.b16 %v958, %v958
          %v991 = vpack.c.b16 %v959, %v959
          %v992 = vpack.c.b16 %v960, %v960
          %v993 = vpack.c.b16 %v961, %v961
          %v994 = vpack.c.b16 %v962, %v962
          %v995 = vpack.c.b16 %v963, %v963
          %v996 = vpack.c.b16 %v964, %v964
          %v997 = vpack.c.b16 %v965, %v965
          %v998 = vpack.c.b16 %v966, %v966
          %v999 = vpack.c.b16 %v967, %v967
          %v1000 = vpack.c.b16 %v968, %v968
          %v1001 = vpack.c.b16 %v969, %v969
          %v1002 = vpack.c.b16 %v970, %v970
          %v1003 = vpack.c.b16 %v971, %v971
          %v1004 = vpack.c.b16 %v972, %v972
          %v1005 = vpack.c.b16 %v973, %v973
          %v1006 = vpack.c.b16 %v974, %v974
          %v1007 = vpack.c.b16 %v975, %v975
          %v1008 = vpack.c.b16 %v976, %v976
          %v1009 = vpack.c.b16 %v977, %v977
          %v1010 = vpack.c.b16 %v978, %v978
          %v1011 = vpack.c.b16 %v979, %v979
          %v1012 = vpack.c.b16 %v980, %v980
          %v1013 = vpack.c.b16 %v981, %v981
          %v1014 = vpack.c.b16 %v982, %v982
          %v1015 = vpack.c.b16 %v983, %v983
          %v1016 = vpack.c.b16 %v984, %v984
          %v1017 = vpack.c.b16 %v985, %v985
          %v1018 = vpack.c.b16 %v986, %v986
          %v1019 = vpack.c.b16 %v987, %v987
          %1052 = vst [vmem:[%s266] sm:$0xf] %v988
          %1053 = vst [vmem:[%s266 + $0x4] sm:$0xf] %v989
          %1054 = vst [vmem:[%s266 + $0x8] sm:$0xf] %v990
          %1055 = vst [vmem:[%s266 + $0xc] sm:$0xf] %v991
          %1056 = vst [vmem:[%s266 + $0x10] sm:$0xf] %v992
          %1057 = vst [vmem:[%s266 + $0x14] sm:$0xf] %v993
          %1058 = vst [vmem:[%s266 + $0x18] sm:$0xf] %v994
          %1059 = vst [vmem:[%s266 + $0x1c] sm:$0xf] %v995
          %1060 = vst [vmem:[%s266 + $0x20] sm:$0xf] %v996
          %1061 = vst [vmem:[%s266 + $0x24] sm:$0xf] %v997
          %1062 = vst [vmem:[%s266 + $0x28] sm:$0xf] %v998
          %1063 = vst [vmem:[%s266 + $0x2c] sm:$0xf] %v999
          %1064 = vst [vmem:[%s266 + $0x30] sm:$0xf] %v1000
          %1065 = vst [vmem:[%s266 + $0x34] sm:$0xf] %v1001
          %1066 = vst [vmem:[%s266 + $0x38] sm:$0xf] %v1002
          %1067 = vst [vmem:[%s266 + $0x3c] sm:$0xf] %v1003
          %1068 = vst [vmem:[%s266 + $0x40] sm:$0xf] %v1004
          %1069 = vst [vmem:[%s266 + $0x44] sm:$0xf] %v1005
          %1070 = vst [vmem:[%s266 + $0x48] sm:$0xf] %v1006
          %1071 = vst [vmem:[%s266 + $0x4c] sm:$0xf] %v1007
          %1072 = vst [vmem:[%s266 + $0x50] sm:$0xf] %v1008
          %1073 = vst [vmem:[%s266 + $0x54] sm:$0xf] %v1009
          %1074 = vst [vmem:[%s266 + $0x58] sm:$0xf] %v1010
          %1075 = vst [vmem:[%s266 + $0x5c] sm:$0xf] %v1011
          %1076 = vst [vmem:[%s266 + $0x60] sm:$0xf] %v1012
          %1077 = vst [vmem:[%s266 + $0x64] sm:$0xf] %v1013
          %1078 = vst [vmem:[%s266 + $0x68] sm:$0xf] %v1014
          %1079 = vst [vmem:[%s266 + $0x6c] sm:$0xf] %v1015
          %1080 = vst [vmem:[%s266 + $0x70] sm:$0xf] %v1016
          %1081 = vst [vmem:[%s266 + $0x74] sm:$0xf] %v1017
          %1082 = vst [vmem:[%s266 + $0x78] sm:$0xf] %v1018
          %1083 = vst [vmem:[%s266 + $0x7c] sm:$0xf] %v1019
        $region44: #{_mm_post.1} parent=35 // pred_fallthru
          _
        %s1084 = sand.u32 %s155, 1
        %s1085 = scalar_lea.sflag [#allocation4], %s1084
        %s1086 = sand.u32 %s155, 1
        %s1087 = smul.addr %s1086, 128
        %s1088 = scalar_lea.vmem [#allocation3], %s1087
        // Predicated region
        $region45: #{_mm_post.1} parent=35 // pred_check
          %p1089 = pneg %p165
        $region46: #{_mm_post.1} parent=35 // pred_check_branch
          %1091 = sbr.rel (%p1089) target = $region48
        $region47: #{_mm_post.1} parent=35 // pred_region
          %s1092 = smul.u32 32, %s23
          %s1094 = ssub.s32 2048, 2048
          %1095 = vsyncadd %s1085, %s1094
          %s1096 = sadd.s32 %s24, %s1092
          %s1097 = smul.addr %s1096, 64
          %s1098 = scalar_lea.hbm %s4, %s1097
          %s1099 = sshll.u32 %s1088, 4
          %s1100 = int_to_ptr.vmem [resolvable:$true] %s1099
          %1105 = dma.vmem_to_hbm [thread:$0]  %s1100, 2048, %s1098, %s1085, 64, 64, 4
        $region48: #{_mm_post.1} parent=35 // pred_fallthru
          _
      $region36: #{_mm_post.1} parent=5 // pred_fallthru
        _
      %p1106 = scmp.le.s32.totalorder 2, %s13
      // Predicated region
      $region49: #{_mm_post.1} parent=5 // pred_check
        %p1107 = pneg %p1106
      $region50: #{_mm_post.1} parent=5 // pred_check_branch
        %1109 = sbr.rel (%p1107) target = $region52
      $region51: #{_mm_post.1} parent=5 // pred_region
        %s1110 = ssub.s32 %s13, 2
        // Predicated region
        $region53: #{_mm_post.1} parent=51 // pred_check
          %p1111 = pneg %p171
        $region54: #{_mm_post.1} parent=51 // pred_check_branch
          %1113 = sbr.rel (%p1111) target = $region56
        $region55: #{_mm_post.1} parent=51 // pred_region
          %s1114 = sand.u32 %s156, 1
          %s1115 = scalar_lea.sflag [#allocation4], %s1114
          %s1116 = sand.u32 %s156, 1
          %s1117 = smul.addr %s1116, 128
          %s1118 = scalar_lea.vmem [#allocation3], %s1117
          %1119 = dma.done %s1115, 2048
        $region56: #{_mm_post.1} parent=51 // pred_fallthru
          _
      $region52: #{_mm_post.1} parent=5 // pred_fallthru
        _
    $region6: #{_mm_post.1} parent=1 // loop_footer
      %s17 = sadd.s32 1, %s13
    $region7: #{_mm_post.1} parent=1 // loop_footer_branch
      %12 = sbr.rel target = $region3
    $region8: #{_mm_post.1} parent=1 // loop_exit
      _
    %1120 = vsyncpa [#allocation4], 1
    %s1121 = scalar_lea.sflag [#allocation4], 1
    %1122 = vsyncpa %s1121, 1

</llo_original>
